<compile_context>
chip_gen: v6e
topology: v6e:2x2x1
jax: 0.10.0
libtpu: 0.0.40
codegen_flags: <defaults>
</compile_context>

<pallas_src>
import jax
import jax.numpy as jnp
import numpy as np
from jax.experimental import pallas as pl
from jax.experimental.pallas import tpu as pltpu

H = 10          # hidden size
R = 2           # LoRA rank
NUM_LORAS = 64
VOCAB = 10      # nn.Embedding(10, 10)

HP = 128        # hidden padded to one full lane tile
VP = 128        # vocab padded likewise (one-hot contraction dim)


def _multi_lora_kernel(ids_ref,      # (BS, 1)  int32   token ids
                       emb_ref,      # (VP, HP) f32     zero-padded embedding table
                       wpack_ref,    # (HP, B*HP) f32   per-request W_eff packed along lanes
                       wh_ref,       # (HP, HP) f32     lm_head weight (pre-transposed, padded)
                       bcomb_ref,    # (1, HP)  f32     folded bias  b_lin @ Wh^T + b_head
                       out_ref):     # (BS, HP) f32
    BS = ids_ref.shape[0]
    VPk, HPk = emb_ref.shape
    B = wpack_ref.shape[1] // HPk
    S = BS // B

    # Embedding lookup as a single one-hot matmul over ALL tokens (MXU path).
    # TODO(synk): at production vocab sizes replace with a row-gather DMA
    # instead of a one-hot matmul against a VMEM-resident table.
    ids = ids_ref[...]                                               # (BS, 1) int32
    iota_v = jax.lax.broadcasted_iota(jnp.int32, (BS, VPk), 1)       # (BS, VP)
    onehot = (iota_v == ids).astype(jnp.float32)                     # (BS, VP)
    x = jnp.dot(onehot, emb_ref[...],
                preferred_element_type=jnp.float32)                  # (BS, HP)

    # Fused base-linear + per-request LoRA: one packed matmul against
    # W_pack[:, b*HP:(b+1)*HP] = W_lin^T + A_{idx_b} @ B_{idx_b}.
    xw = jnp.dot(x, wpack_ref[...],
                 preferred_element_type=jnp.float32)                 # (BS, B*HP)

    # Each request keeps only its own lane-aligned column block (VPU select,
    # no concatenate / relayout).  B is tiny & static -> unrolled.
    row = jax.lax.broadcasted_iota(jnp.int32, (BS, HPk), 0)          # (BS, HP)
    y = jnp.zeros((BS, HPk), jnp.float32)
    for b in range(B):
        block = xw[:, b * HPk:(b + 1) * HPk]                         # static, lane-aligned
        in_req = (row >= b * S) & (row < (b + 1) * S)
        y = y + jnp.where(in_req, block, 0.0)

    # lm_head for all tokens with the folded bias.
    out_ref[...] = (jnp.dot(y, wh_ref[...],
                            preferred_element_type=jnp.float32)
                    + bcomb_ref[...])


def multi_lora_forward(input_ids, lora_indices, emb, w_lin, b_lin,
                       loras_a, loras_b, w_head, b_head):
    B, S = input_ids.shape
    V, Hh = emb.shape
    BS = B * S
    f32 = jnp.float32

    # ---- Weight prep in XLA (constant-foldable / reusable across calls) ----
    emb_p = jnp.zeros((VP, HP), f32).at[:V, :Hh].set(emb.astype(f32))
    wl_t = jnp.zeros((HP, HP), f32).at[:Hh, :Hh].set(jnp.asarray(w_lin, f32).T)
    wh_t = jnp.zeros((HP, HP), f32).at[:Hh, :Hh].set(jnp.asarray(w_head, f32).T)

    # Precompute the rank-2 LoRA products once and gather the per-request
    # effective linear weight  W_eff_b = W_lin^T + A_{idx_b} @ B_{idx_b}.
    ab_bank = jnp.einsum('nhr,nrk->nhk', loras_a.astype(f32),
                         loras_b.astype(f32))                        # (N, H, H)
    ab_sel = ab_bank[lora_indices]                                   # (B, H, H)
    w_eff = jnp.zeros((B, HP, HP), f32).at[:, :Hh, :Hh].set(ab_sel) + wl_t[None]
    # Pack along lanes so the B per-request matmuls fuse into one MXU matmul.
    w_pack = jnp.transpose(w_eff, (1, 0, 2)).reshape(HP, B * HP)     # (HP, B*HP)

    # Fold both biases:  out = (x @ W_eff) @ Wh^T + (b_lin @ Wh^T + b_head)
    b_comb = jnp.zeros((1, HP), f32).at[0, :Hh].set(
        jnp.asarray(b_lin, f32) @ jnp.asarray(w_head, f32).T + jnp.asarray(b_head, f32))

    ids2 = input_ids.reshape(BS, 1).astype(jnp.int32)

    out_p = pl.pallas_call(
        _multi_lora_kernel,
        out_shape=jax.ShapeDtypeStruct((BS, HP), f32),
        grid=(1,),                                         # single invocation
        in_specs=[
            pl.BlockSpec((BS, 1),      lambda i: (0, 0)),  # token ids
            pl.BlockSpec((VP, HP),     lambda i: (0, 0)),  # embedding table (padded)
            pl.BlockSpec((HP, B * HP), lambda i: (0, 0)),  # packed per-request W_eff
            pl.BlockSpec((HP, HP),     lambda i: (0, 0)),  # lm_head W^T (padded)
            pl.BlockSpec((1, HP),      lambda i: (0, 0)),  # folded bias
        ],
        out_specs=pl.BlockSpec((BS, HP), lambda i: (0, 0)),
        compiler_params=pltpu.CompilerParams(
            dimension_semantics=("arbitrary",)),
    )(ids2, emb_p, w_pack, wh_t, b_comb)

    return out_p[:, :Hh].reshape(B, S, Hh)


def reference_forward(input_ids, lora_indices, emb, w_lin, b_lin,
                      loras_a, loras_b, w_head, b_head):
    x = emb[input_ids]                                   # (B, S, H)
    y = x @ w_lin.T + b_lin
    la = loras_a[lora_indices]                           # (B, H, R)
    lb = loras_b[lora_indices]                           # (B, R, H)
    y = y + jnp.einsum('bsh,bhr,brk->bsk', x, la, lb)
    return y @ w_head.T + b_head


if __name__ == "__main__":
    key = jax.random.PRNGKey(0)
    (k_emb, k_wl, k_bl, k_wh, k_bh, k_la, k_lb, k_ids, k_idx) = jax.random.split(key, 9)

    B, S = 2, 8

    # Deterministic synthetic parameters (shapes from the module __init__).
    emb = jax.random.normal(k_emb, (VOCAB, H), dtype=jnp.float32)
    w_lin = jax.random.normal(k_wl, (H, H), dtype=jnp.float32) * 0.1
    b_lin = jax.random.normal(k_bl, (H,), dtype=jnp.float32) * 0.1
    w_head = jax.random.normal(k_wh, (H, H), dtype=jnp.float32) * 0.1
    b_head = jax.random.normal(k_bh, (H,), dtype=jnp.float32) * 0.1
    loras_a = jax.random.normal(k_la, (NUM_LORAS, H, R), dtype=jnp.float32)
    loras_b = jax.random.normal(k_lb, (NUM_LORAS, R, H), dtype=jnp.float32)

    input_ids = jax.random.randint(k_ids, (B, S), 0, VOCAB, dtype=jnp.int32)
    lora_indices = jax.random.randint(k_idx, (B,), 0, NUM_LORAS, dtype=jnp.int32)

    out = multi_lora_forward(input_ids, lora_indices, emb, w_lin, b_lin,
                             loras_a, loras_b, w_head, b_head)
    out = jax.block_until_ready(out)

    ref = reference_forward(input_ids, lora_indices, emb, w_lin, b_lin,
                            loras_a, loras_b, w_head, b_head)

    if not np.allclose(np.asarray(out), np.asarray(ref), rtol=1e-4, atol=1e-4):
        raise AssertionError("Pallas kernel output mismatch vs reference")

    print("KERNEL_OK")
</pallas_src>

<mosaic_0001>
module attributes {stable_mosaic.version = 11 : i64} {
  func.func @_multi_lora_kernel(%arg0: i32, %arg1: memref<16x1xi32, #tpu.memory_space<vmem>>, %arg2: memref<128x128xf32, #tpu.memory_space<vmem>>, %arg3: memref<128x256xf32, #tpu.memory_space<vmem>>, %arg4: memref<128x128xf32, #tpu.memory_space<vmem>>, %arg5: memref<1x128xf32, #tpu.memory_space<vmem>>, %arg6: memref<16x128xf32, #tpu.memory_space<vmem>>) attributes {dimension_semantics = [#tpu.dimension_semantics<arbitrary>], iteration_bounds = array<i64: 1>, scalar_prefetch = 0 : i64, scratch_operands = 0 : i64, tpu.core_type = #tpu.core_type<tc>, window_params = [{pipeline_mode = #tpu.pipeline_mode<synchronous>, transform_indices = @transform_0, window_bounds = array<i64: 16, 1>}, {pipeline_mode = #tpu.pipeline_mode<synchronous>, transform_indices = @transform_1, window_bounds = array<i64: 128, 128>}, {pipeline_mode = #tpu.pipeline_mode<synchronous>, transform_indices = @transform_2, window_bounds = array<i64: 128, 256>}, {pipeline_mode = #tpu.pipeline_mode<synchronous>, transform_indices = @transform_3, window_bounds = array<i64: 128, 128>}, {pipeline_mode = #tpu.pipeline_mode<synchronous>, transform_indices = @transform_4, window_bounds = array<i64: 1, 128>}, {pipeline_mode = #tpu.pipeline_mode<synchronous>, transform_indices = @transform_5, window_bounds = array<i64: 16, 128>}]} {
    %c0 = arith.constant 0 : index
    %c0_0 = arith.constant 0 : index
    %0 = vector.load %arg1[%c0, %c0_0] : memref<16x1xi32, #tpu.memory_space<vmem>>, vector<16x1xi32>
    %1 = tpu.iota {dimensions = array<i32: 1>} : vector<16x128xi32>
    %2 = vector.broadcast %0 : vector<16x1xi32> to vector<16x128xi32>
    %3 = arith.cmpi eq, %1, %2 : vector<16x128xi32>
    %4 = arith.extui %3 : vector<16x128xi1> to vector<16x128xi32>
    %5 = arith.sitofp %4 : vector<16x128xi32> to vector<16x128xf32>
    %c0_1 = arith.constant 0 : index
    %c0_2 = arith.constant 0 : index
    %6 = vector.load %arg2[%c0_1, %c0_2] : memref<128x128xf32, #tpu.memory_space<vmem>>, vector<128x128xf32>
    %cst = arith.constant dense<0.000000e+00> : vector<16x128xf32>
    %7 = tpu.matmul %5, %6, %cst {dimension_numbers = #tpu.dot_dimension_numbers<[1], [0], [0], [1], [0, 0, 1, 1], [], []>} : vector<16x128xf32>, vector<128x128xf32>, vector<16x128xf32> -> vector<16x128xf32>
    %c0_3 = arith.constant 0 : index
    %c0_4 = arith.constant 0 : index
    %8 = vector.load %arg3[%c0_3, %c0_4] : memref<128x256xf32, #tpu.memory_space<vmem>>, vector<128x256xf32>
    %cst_5 = arith.constant dense<0.000000e+00> : vector<16x256xf32>
    %9 = tpu.matmul %7, %8, %cst_5 {dimension_numbers = #tpu.dot_dimension_numbers<[1], [0], [0], [1], [0, 0, 1, 1], [], []>} : vector<16x128xf32>, vector<128x256xf32>, vector<16x256xf32> -> vector<16x256xf32>
    %10 = tpu.iota {dimensions = array<i32: 0>} : vector<16x128xi32>
    %cst_6 = arith.constant 0.000000e+00 : f32
    %11 = vector.broadcast %cst_6 : f32 to vector<16x128xf32>
    %12 = vector.extract_strided_slice %9 {offsets = [0, 0], sizes = [16, 128], strides = [1, 1]} : vector<16x256xf32> to vector<16x128xf32>
    %c0_i32 = arith.constant 0 : i32
    %13 = vector.broadcast %c0_i32 : i32 to vector<16x128xi32>
    %14 = arith.cmpi sge, %10, %13 : vector<16x128xi32>
    %c8_i32 = arith.constant 8 : i32
    %15 = vector.broadcast %c8_i32 : i32 to vector<16x128xi32>
    %16 = arith.cmpi slt, %10, %15 : vector<16x128xi32>
    %17 = arith.andi %14, %16 : vector<16x128xi1>
    %cst_7 = arith.constant 0.000000e+00 : f32
    %18 = vector.broadcast %cst_7 : f32 to vector<16x128xf32>
    %19 = arith.select %17, %12, %18 : vector<16x128xi1>, vector<16x128xf32>
    %20 = arith.addf %11, %19 : vector<16x128xf32>
    %21 = vector.extract_strided_slice %9 {offsets = [0, 128], sizes = [16, 128], strides = [1, 1]} : vector<16x256xf32> to vector<16x128xf32>
    %c8_i32_8 = arith.constant 8 : i32
    %22 = vector.broadcast %c8_i32_8 : i32 to vector<16x128xi32>
    %23 = arith.cmpi sge, %10, %22 : vector<16x128xi32>
    %c16_i32 = arith.constant 16 : i32
    %24 = vector.broadcast %c16_i32 : i32 to vector<16x128xi32>
    %25 = arith.cmpi slt, %10, %24 : vector<16x128xi32>
    %26 = arith.andi %23, %25 : vector<16x128xi1>
    %cst_9 = arith.constant 0.000000e+00 : f32
    %27 = vector.broadcast %cst_9 : f32 to vector<16x128xf32>
    %28 = arith.select %26, %21, %27 : vector<16x128xi1>, vector<16x128xf32>
    %29 = arith.addf %20, %28 : vector<16x128xf32>
    %c0_10 = arith.constant 0 : index
    %c0_11 = arith.constant 0 : index
    %30 = vector.load %arg4[%c0_10, %c0_11] : memref<128x128xf32, #tpu.memory_space<vmem>>, vector<128x128xf32>
    %cst_12 = arith.constant dense<0.000000e+00> : vector<16x128xf32>
    %31 = tpu.matmul %29, %30, %cst_12 {dimension_numbers = #tpu.dot_dimension_numbers<[1], [0], [0], [1], [0, 0, 1, 1], [], []>} : vector<16x128xf32>, vector<128x128xf32>, vector<16x128xf32> -> vector<16x128xf32>
    %c0_13 = arith.constant 0 : index
    %c0_14 = arith.constant 0 : index
    %32 = vector.load %arg5[%c0_13, %c0_14] : memref<1x128xf32, #tpu.memory_space<vmem>>, vector<1x128xf32>
    %33 = vector.broadcast %32 : vector<1x128xf32> to vector<16x128xf32>
    %34 = arith.addf %31, %33 : vector<16x128xf32>
    %c0_15 = arith.constant 0 : index
    %c0_16 = arith.constant 0 : index
    %35 = vector.load %arg6[%c0_15, %c0_16] : memref<16x128xf32, #tpu.memory_space<vmem>>, vector<16x128xf32>
    tpu.vector_store %arg6[%c0_15, %c0_16], %34 {strides = array<i32>} : memref<16x128xf32, #tpu.memory_space<vmem>>, vector<16x128xf32>,
    return
  }
  func.func @transform_0(%arg0: i32) -> (i32, i32) {
    %c0_i32 = arith.constant 0 : i32
    %c0_i32_0 = arith.constant 0 : i32
    %c0_i32_1 = arith.constant 0 : i32
    return %c0_i32, %c0_i32_0 : i32, i32
  }
  func.func @transform_1(%arg0: i32) -> (i32, i32) {
    %c0_i32 = arith.constant 0 : i32
    %c0_i32_0 = arith.constant 0 : i32
    %c0_i32_1 = arith.constant 0 : i32
    return %c0_i32, %c0_i32_0 : i32, i32
  }
  func.func @transform_2(%arg0: i32) -> (i32, i32) {
    %c0_i32 = arith.constant 0 : i32
    %c0_i32_0 = arith.constant 0 : i32
    %c0_i32_1 = arith.constant 0 : i32
    return %c0_i32, %c0_i32_0 : i32, i32
  }
  func.func @transform_3(%arg0: i32) -> (i32, i32) {
    %c0_i32 = arith.constant 0 : i32
    %c0_i32_0 = arith.constant 0 : i32
    %c0_i32_1 = arith.constant 0 : i32
    return %c0_i32, %c0_i32_0 : i32, i32
  }
  func.func @transform_4(%arg0: i32) -> (i32, i32) {
    %c0_i32 = arith.constant 0 : i32
    %c0_i32_0 = arith.constant 0 : i32
    %c0_i32_1 = arith.constant 0 : i32
    return %c0_i32, %c0_i32_0 : i32, i32
  }
  func.func @transform_5(%arg0: i32) -> (i32, i32) {
    %c0_i32 = arith.constant 0 : i32
    %c0_i32_0 = arith.constant 0 : i32
    %c0_i32_1 = arith.constant 0 : i32
    return %c0_i32, %c0_i32_0 : i32, i32
  }
}

</mosaic_0001>

<llo_original>
// kernel: tpu_custom_call.1
$region0: #{tpu_custom_call.1}
  #allocation0 [shape = 'u32[]', space=smem, size = 0x4, offset = 0x4, fixed_abs, tag = 'smem constant byte address 0x4 - core index']
  #allocation1 [shape = 'u32[144,128]{1,0:T(1,128)}', space=vmem, size = 0x12000, scoped, tag = 'internal scratch']
  %s0 = inlined_call_operand.vmem [shape: s32[16,1], index: 0, kind: input, shape index: {}]
  %s1 = inlined_call_operand.hbm [shape: f32[128,128], index: 1, kind: input, shape index: {}]
  %s2 = inlined_call_operand.hbm [shape: f32[128,256], index: 2, kind: input, shape index: {}]
  %s3 = inlined_call_operand.hbm [shape: f32[128,128], index: 3, kind: input, shape index: {}]
  %s4 = inlined_call_operand.vmem [shape: f32[1,128], index: 4, kind: input, shape index: {}]
  %s5 = inlined_call_operand.hbm [shape: f32[16,128], index: 5, kind: output, shape index: {}]
  %s6 = sld [smem:[#allocation0]]
  $region42: #{tpu_custom_call.1} parent=0
    _
  %s8 = ssub.s32 1, %s6
  %s9 = scalar_select 0, %s8, %s6
  $region1: #{tpu_custom_call.1} parent=0
    #allocation2 [shape = 'u8[65536]{0}', space=vmem, size = 0x10000, scoped, tag = 'input window, operand 1, single buffered']
    #allocation3 [shape = 's32[1]{0}', space=sflag, size = 0x4, scoped, tag = 'scoped memory for tpu_custom_call.1']
    #allocation4 [shape = 's32[1]{0}', space=sflag, size = 0x4, scoped, tag = 'scoped memory for tpu_custom_call.1']
    #allocation5 [shape = 'u8[131072]{0}', space=vmem, size = 0x20000, scoped, tag = 'input window, operand 2, single buffered']
    #allocation6 [shape = 's32[1]{0}', space=sflag, size = 0x4, scoped, tag = 'scoped memory for tpu_custom_call.1']
    #allocation7 [shape = 'u8[65536]{0}', space=vmem, size = 0x10000, scoped, tag = 'input window, operand 3, single buffered']
    #allocation8 [shape = 'u8[8192]{0}', space=vmem, size = 0x2000, scoped, tag = 'output window, operand 0, single buffered']
    %10 = vsyncpa [#allocation3], 0
    %11 = vsyncpa [#allocation6], 0
    %12 = vsyncpa [#allocation4], 0
    // Predicated region
    $region2: #{tpu_custom_call.1} parent=1 // pred_check
      _
    $region3: #{tpu_custom_call.1} parent=1 // pred_check_branch
      %14 = sbr.rel (0) target = $region5
    $region4: #{tpu_custom_call.1} parent=1 // pred_region
      _
    $region5: #{tpu_custom_call.1} parent=1 // pred_fallthru
      _
    // Predicated region
    $region6: #{tpu_custom_call.1} parent=1 // pred_check
      _
    $region7: #{tpu_custom_call.1} parent=1 // pred_check_branch
      %16 = sbr.rel (0) target = $region9
    $region8: #{tpu_custom_call.1} parent=1 // pred_region
      %s18 = ssub.s32 2048, 2048
      %19 = vsyncadd [#allocation3], %s18
      %s20 = sshll.u32 [#allocation2], 4
      %s21 = int_to_ptr.vmem [resolvable:$true] %s20
      %26 = dma.hbm_to_vmem [thread:$0]  %s1, 2048, %s21, [#allocation3], 128, 128, 8
    $region9: #{tpu_custom_call.1} parent=1 // pred_fallthru
      _
    // Predicated region
    $region10: #{tpu_custom_call.1} parent=1 // pred_check
      _
    $region11: #{tpu_custom_call.1} parent=1 // pred_check_branch
      %28 = sbr.rel (0) target = $region13
    $region12: #{tpu_custom_call.1} parent=1 // pred_region
      %s30 = ssub.s32 4096, 4096
      %31 = vsyncadd [#allocation6], %s30
      %s32 = sshll.u32 [#allocation5], 4
      %s33 = int_to_ptr.vmem [resolvable:$true] %s32
      %38 = dma.hbm_to_vmem [thread:$0]  %s2, 4096, %s33, [#allocation6], 256, 256, 16
    $region13: #{tpu_custom_call.1} parent=1 // pred_fallthru
      _
    // Predicated region
    $region14: #{tpu_custom_call.1} parent=1 // pred_check
      _
    $region15: #{tpu_custom_call.1} parent=1 // pred_check_branch
      %40 = sbr.rel (0) target = $region17
    $region16: #{tpu_custom_call.1} parent=1 // pred_region
      %s42 = ssub.s32 2048, 2048
      %43 = vsyncadd [#allocation6], %s42
      %s44 = sshll.u32 [#allocation7], 4
      %s45 = int_to_ptr.vmem [resolvable:$true] %s44
      %50 = dma.hbm_to_vmem [thread:$0]  %s3, 2048, %s45, [#allocation6], 128, 128, 8
    $region17: #{tpu_custom_call.1} parent=1 // pred_fallthru
      _
    // Predicated region
    $region18: #{tpu_custom_call.1} parent=1 // pred_check
      _
    $region19: #{tpu_custom_call.1} parent=1 // pred_check_branch
      %52 = sbr.rel (0) target = $region21
    $region20: #{tpu_custom_call.1} parent=1 // pred_region
      _
    $region21: #{tpu_custom_call.1} parent=1 // pred_fallthru
      _
    // Predicated region
    $region22: #{tpu_custom_call.1} parent=1 // pred_check
      _
    $region23: #{tpu_custom_call.1} parent=1 // pred_check_branch
      %54 = sbr.rel (0) target = $region25
    $region24: #{tpu_custom_call.1} parent=1 // pred_region
      %55 = dma.done [#allocation3], 2048
    $region25: #{tpu_custom_call.1} parent=1 // pred_fallthru
      _
    // Predicated region
    $region26: #{tpu_custom_call.1} parent=1 // pred_check
      _
    $region27: #{tpu_custom_call.1} parent=1 // pred_check_branch
      %57 = sbr.rel (0) target = $region29
    $region28: #{tpu_custom_call.1} parent=1 // pred_region
      %58 = dma.done [#allocation6], 4096
    $region29: #{tpu_custom_call.1} parent=1 // pred_fallthru
      _
    // Predicated region
    $region30: #{tpu_custom_call.1} parent=1 // pred_check
      _
    $region31: #{tpu_custom_call.1} parent=1 // pred_check_branch
      %60 = sbr.rel (0) target = $region33
    $region32: #{tpu_custom_call.1} parent=1 // pred_region
      %61 = dma.done [#allocation6], 2048
    $region33: #{tpu_custom_call.1} parent=1 // pred_fallthru
      _
    %v62 = vld [vmem:[%s0] sm:$0xff]
    %v63 = vld [vmem:[%s0 + $0x8] sm:$0xff]
    %v64 = vlaneseq
    %v65 = vand.u32 %v64, 127
    %66 = vset.pattern.permute.xlu0 0
    %67 = vperm.xlu0 %66, %v62
    %v68 = vpop.permute.xlu0 %67
    %69 = vset.pattern.permute.xlu0 0
    %70 = vperm.xlu0 %69, %v63
    %v71 = vpop.permute.xlu0 %70
    %vm72 = vcmp.eq.s32.totalorder %v65, %v68
    %vm73 = vcmp.eq.s32.totalorder %v65, %v71
    %v74 = vsel %vm72, 1, 0
    %v75 = vsel %vm73, 1, 0
    %v76 = vcvt.s32.f32 %v74
    %v77 = vcvt.s32.f32 %v75
    %v78 = vld [vmem:[#allocation2] sm:$0xff]
    %v79 = vld [vmem:[#allocation2 + $0x8] sm:$0xff]
    %v80 = vld [vmem:[#allocation2 + $0x10] sm:$0xff]
    %v81 = vld [vmem:[#allocation2 + $0x18] sm:$0xff]
    %v82 = vld [vmem:[#allocation2 + $0x20] sm:$0xff]
    %v83 = vld [vmem:[#allocation2 + $0x28] sm:$0xff]
    %v84 = vld [vmem:[#allocation2 + $0x30] sm:$0xff]
    %v85 = vld [vmem:[#allocation2 + $0x38] sm:$0xff]
    %v86 = vld [vmem:[#allocation2 + $0x40] sm:$0xff]
    %v87 = vld [vmem:[#allocation2 + $0x48] sm:$0xff]
    %v88 = vld [vmem:[#allocation2 + $0x50] sm:$0xff]
    %v89 = vld [vmem:[#allocation2 + $0x58] sm:$0xff]
    %v90 = vld [vmem:[#allocation2 + $0x60] sm:$0xff]
    %v91 = vld [vmem:[#allocation2 + $0x68] sm:$0xff]
    %v92 = vld [vmem:[#allocation2 + $0x70] sm:$0xff]
    %v93 = vld [vmem:[#allocation2 + $0x78] sm:$0xff]
    %94 = vmatprep.subr.mxu0 0.0
    %95 = vmatpush1.msra.mxu0 %v93
    %96 = vmatprep.subr.mxu0 0.0
    %97 = vmatpush1.msra.mxu0 %v92
    %98 = vmatprep.subr.mxu0 0.0
    %99 = vmatpush1.msra.mxu0 %v91
    %100 = vmatprep.subr.mxu0 0.0
    %101 = vmatpush1.msra.mxu0 %v90
    %102 = vmatprep.subr.mxu0 0.0
    %103 = vmatpush1.msra.mxu0 %v89
    %104 = vmatprep.subr.mxu0 0.0
    %105 = vmatpush1.msra.mxu0 %v88
    %106 = vmatprep.subr.mxu0 0.0
    %107 = vmatpush1.msra.mxu0 %v87
    %108 = vmatprep.subr.mxu0 0.0
    %109 = vmatpush1.msra.mxu0 %v86
    %110 = vmatprep.subr.mxu0 0.0
    %111 = vmatpush1.msra.mxu0 %v85
    %112 = vmatprep.subr.mxu0 0.0
    %113 = vmatpush1.msra.mxu0 %v84
    %114 = vmatprep.subr.mxu0 0.0
    %115 = vmatpush1.msra.mxu0 %v83
    %116 = vmatprep.subr.mxu0 0.0
    %117 = vmatpush1.msra.mxu0 %v82
    %118 = vmatprep.subr.mxu0 0.0
    %119 = vmatpush1.msra.mxu0 %v81
    %120 = vmatprep.subr.mxu0 0.0
    %121 = vmatpush1.msra.mxu0 %v80
    %122 = vmatprep.subr.mxu0 0.0
    %123 = vmatpush1.msra.mxu0 %v79
    %124 = vmatprep.subr.mxu0 0.0
    %125 = vmatpush1.msra.mxu0 %v78
    %126 = vmatprep.subr.mxu0 0.0
    %127 = vmatpush2.msra.mxu0 0.0
    %128 = vmatprep.subr.mxu0 0.0
    %129 = vmatpush2.msra.mxu0 0.0
    %130 = vmatprep.subr.mxu0 0.0
    %131 = vmatpush2.msra.mxu0 0.0
    %132 = vmatprep.subr.mxu0 0.0
    %133 = vmatpush2.msra.mxu0 0.0
    %134 = vmatprep.subr.mxu0 0.0
    %135 = vmatpush2.msra.mxu0 0.0
    %136 = vmatprep.subr.mxu0 0.0
    %137 = vmatpush2.msra.mxu0 0.0
    %138 = vmatprep.subr.mxu0 0.0
    %139 = vmatpush2.msra.mxu0 0.0
    %140 = vmatprep.subr.mxu0 0.0
    %141 = vmatpush2.msra.mxu0 0.0
    %142 = vmatprep.subr.mxu0 0.0
    %143 = vmatpush2.msra.mxu0 0.0
    %144 = vmatprep.subr.mxu0 0.0
    %145 = vmatpush2.msra.mxu0 0.0
    %146 = vmatprep.subr.mxu0 0.0
    %147 = vmatpush2.msra.mxu0 0.0
    %148 = vmatprep.subr.mxu0 0.0
    %149 = vmatpush2.msra.mxu0 0.0
    %150 = vmatprep.subr.mxu0 0.0
    %151 = vmatpush2.msra.mxu0 0.0
    %152 = vmatprep.subr.mxu0 0.0
    %153 = vmatpush2.msra.mxu0 0.0
    %154 = vmatprep.subr.mxu0 0.0
    %155 = vmatpush2.msra.mxu0 0.0
    %156 = vmatprep.subr.mxu0 0.0
    %157 = vmatpush2.msra.mxu0 0.0
    %158 = vmatprep.mubr.f32.mxu0 0.0
    %159 = vmatmul.mubr.f32.gmra.mxu0 %v76
    %v160 = vpop.f32.mrf.mxu0
    %v161 = vadd.f32 0.0, %v160
    %v162 = vpop.f32.mrf.mxu0
    %163 = vmatprep.mubr.f32.mxu0 0.0
    %164 = vmatmul.mubr.f32.gmra.mxu0 %v77
    %v165 = vpop.f32.mrf.mxu0
    %v166 = vadd.f32 0.0, %v165
    %v167 = vpop.f32.mrf.mxu0
    %168 = vdwg.mxu0
    %v169 = vld [vmem:[#allocation5] sm:$0xff]
    %v170 = vld [vmem:[#allocation5 + $0x8] sm:$0xff]
    %v171 = vld [vmem:[#allocation5 + $0x10] sm:$0xff]
    %v172 = vld [vmem:[#allocation5 + $0x18] sm:$0xff]
    %v173 = vld [vmem:[#allocation5 + $0x20] sm:$0xff]
    %v174 = vld [vmem:[#allocation5 + $0x28] sm:$0xff]
    %v175 = vld [vmem:[#allocation5 + $0x30] sm:$0xff]
    %v176 = vld [vmem:[#allocation5 + $0x38] sm:$0xff]
    %v177 = vld [vmem:[#allocation5 + $0x40] sm:$0xff]
    %v178 = vld [vmem:[#allocation5 + $0x48] sm:$0xff]
    %v179 = vld [vmem:[#allocation5 + $0x50] sm:$0xff]
    %v180 = vld [vmem:[#allocation5 + $0x58] sm:$0xff]
    %v181 = vld [vmem:[#allocation5 + $0x60] sm:$0xff]
    %v182 = vld [vmem:[#allocation5 + $0x68] sm:$0xff]
    %v183 = vld [vmem:[#allocation5 + $0x70] sm:$0xff]
    %v184 = vld [vmem:[#allocation5 + $0x78] sm:$0xff]
    %v185 = vld [vmem:[#allocation5 + $0x80] sm:$0xff]
    %v186 = vld [vmem:[#allocation5 + $0x88] sm:$0xff]
    %v187 = vld [vmem:[#allocation5 + $0x90] sm:$0xff]
    %v188 = vld [vmem:[#allocation5 + $0x98] sm:$0xff]
    %v189 = vld [vmem:[#allocation5 + $0xa0] sm:$0xff]
    %v190 = vld [vmem:[#allocation5 + $0xa8] sm:$0xff]
    %v191 = vld [vmem:[#allocation5 + $0xb0] sm:$0xff]
    %v192 = vld [vmem:[#allocation5 + $0xb8] sm:$0xff]
    %v193 = vld [vmem:[#allocation5 + $0xc0] sm:$0xff]
    %v194 = vld [vmem:[#allocation5 + $0xc8] sm:$0xff]
    %v195 = vld [vmem:[#allocation5 + $0xd0] sm:$0xff]
    %v196 = vld [vmem:[#allocation5 + $0xd8] sm:$0xff]
    %v197 = vld [vmem:[#allocation5 + $0xe0] sm:$0xff]
    %v198 = vld [vmem:[#allocation5 + $0xe8] sm:$0xff]
    %v199 = vld [vmem:[#allocation5 + $0xf0] sm:$0xff]
    %v200 = vld [vmem:[#allocation5 + $0xf8] sm:$0xff]
    %201 = vmatprep.subr.mxu0 %v200
    %202 = vmatpush1.msra.mxu0 %v199
    %203 = vmatprep.subr.mxu0 %v198
    %204 = vmatpush1.msra.mxu0 %v197
    %205 = vmatprep.subr.mxu0 %v196
    %206 = vmatpush1.msra.mxu0 %v195
    %207 = vmatprep.subr.mxu0 %v194
    %208 = vmatpush1.msra.mxu0 %v193
    %209 = vmatprep.subr.mxu0 %v192
    %210 = vmatpush1.msra.mxu0 %v191
    %211 = vmatprep.subr.mxu0 %v190
    %212 = vmatpush1.msra.mxu0 %v189
    %213 = vmatprep.subr.mxu0 %v188
    %214 = vmatpush1.msra.mxu0 %v187
    %215 = vmatprep.subr.mxu0 %v186
    %216 = vmatpush1.msra.mxu0 %v185
    %217 = vmatprep.subr.mxu0 %v184
    %218 = vmatpush1.msra.mxu0 %v183
    %219 = vmatprep.subr.mxu0 %v182
    %220 = vmatpush1.msra.mxu0 %v181
    %221 = vmatprep.subr.mxu0 %v180
    %222 = vmatpush1.msra.mxu0 %v179
    %223 = vmatprep.subr.mxu0 %v178
    %224 = vmatpush1.msra.mxu0 %v177
    %225 = vmatprep.subr.mxu0 %v176
    %226 = vmatpush1.msra.mxu0 %v175
    %227 = vmatprep.subr.mxu0 %v174
    %228 = vmatpush1.msra.mxu0 %v173
    %229 = vmatprep.subr.mxu0 %v172
    %230 = vmatpush1.msra.mxu0 %v171
    %231 = vmatprep.subr.mxu0 %v170
    %232 = vmatpush1.msra.mxu0 %v169
    %233 = vmatprep.subr.mxu0 0.0
    %234 = vmatpush2.msra.mxu0 0.0
    %235 = vmatprep.subr.mxu0 0.0
    %236 = vmatpush2.msra.mxu0 0.0
    %237 = vmatprep.subr.mxu0 0.0
    %238 = vmatpush2.msra.mxu0 0.0
    %239 = vmatprep.subr.mxu0 0.0
    %240 = vmatpush2.msra.mxu0 0.0
    %241 = vmatprep.subr.mxu0 0.0
    %242 = vmatpush2.msra.mxu0 0.0
    %243 = vmatprep.subr.mxu0 0.0
    %244 = vmatpush2.msra.mxu0 0.0
    %245 = vmatprep.subr.mxu0 0.0
    %246 = vmatpush2.msra.mxu0 0.0
    %247 = vmatprep.subr.mxu0 0.0
    %248 = vmatpush2.msra.mxu0 0.0
    %249 = vmatprep.subr.mxu0 0.0
    %250 = vmatpush2.msra.mxu0 0.0
    %251 = vmatprep.subr.mxu0 0.0
    %252 = vmatpush2.msra.mxu0 0.0
    %253 = vmatprep.subr.mxu0 0.0
    %254 = vmatpush2.msra.mxu0 0.0
    %255 = vmatprep.subr.mxu0 0.0
    %256 = vmatpush2.msra.mxu0 0.0
    %257 = vmatprep.subr.mxu0 0.0
    %258 = vmatpush2.msra.mxu0 0.0
    %259 = vmatprep.subr.mxu0 0.0
    %260 = vmatpush2.msra.mxu0 0.0
    %261 = vmatprep.subr.mxu0 0.0
    %262 = vmatpush2.msra.mxu0 0.0
    %263 = vmatprep.subr.mxu0 0.0
    %264 = vmatpush2.msra.mxu0 0.0
    %265 = vmatprep.mubr.f32.mxu0 0.0
    %266 = vmatmul.mubr.f32.gmra.mxu0 %v161
    %v267 = vpop.f32.mrf.mxu0
    %v268 = vadd.f32 0.0, %v267
    %v269 = vpop.f32.mrf.mxu0
    %v270 = vadd.f32 0.0, %v269
    %271 = vmatprep.mubr.f32.mxu0 0.0
    %272 = vmatmul.mubr.f32.gmra.mxu0 %v166
    %v273 = vpop.f32.mrf.mxu0
    %v274 = vadd.f32 0.0, %v273
    %v275 = vpop.f32.mrf.mxu0
    %v276 = vadd.f32 0.0, %v275
    %277 = vdwg.mxu0
    %v278 = vlaneseq
    %v279 = vshrl.u32 %v278, 7
    %v280 = vadd.s32 %v279, 8
    %vm281 = vcmp.ge.s32.totalorder %v279, 0
    %vm282 = vcmp.ge.s32.totalorder %v280, 0
    %vm283 = vcmp.lt.s32.totalorder %v279, 8
    %vm284 = vcmp.lt.s32.totalorder %v280, 8
    %vm285 = vmand %vm281, %vm283
    %vm286 = vmand %vm282, %vm284
    %v287 = vsel %vm285, %v268, 0.0
    %v288 = vsel %vm286, %v274, 0.0
    %v289 = vadd.f32 %v287, 0.0
    %v290 = vadd.f32 %v288, 0.0
    %vm291 = vcmp.ge.s32.totalorder %v279, 8
    %vm292 = vcmp.ge.s32.totalorder %v280, 8
    %vm293 = vcmp.lt.s32.totalorder %v279, 16
    %vm294 = vcmp.lt.s32.totalorder %v280, 16
    %vm295 = vmand %vm291, %vm293
    %vm296 = vmand %vm292, %vm294
    %v297 = vsel %vm295, %v270, 0.0
    %v298 = vsel %vm296, %v276, 0.0
    %v299 = vadd.f32 %v289, %v297
    %v300 = vadd.f32 %v290, %v298
    %v301 = vld [vmem:[#allocation7] sm:$0xff]
    %v302 = vld [vmem:[#allocation7 + $0x8] sm:$0xff]
    %v303 = vld [vmem:[#allocation7 + $0x10] sm:$0xff]
    %v304 = vld [vmem:[#allocation7 + $0x18] sm:$0xff]
    %v305 = vld [vmem:[#allocation7 + $0x20] sm:$0xff]
    %v306 = vld [vmem:[#allocation7 + $0x28] sm:$0xff]
    %v307 = vld [vmem:[#allocation7 + $0x30] sm:$0xff]
    %v308 = vld [vmem:[#allocation7 + $0x38] sm:$0xff]
    %v309 = vld [vmem:[#allocation7 + $0x40] sm:$0xff]
    %v310 = vld [vmem:[#allocation7 + $0x48] sm:$0xff]
    %v311 = vld [vmem:[#allocation7 + $0x50] sm:$0xff]
    %v312 = vld [vmem:[#allocation7 + $0x58] sm:$0xff]
    %v313 = vld [vmem:[#allocation7 + $0x60] sm:$0xff]
    %v314 = vld [vmem:[#allocation7 + $0x68] sm:$0xff]
    %v315 = vld [vmem:[#allocation7 + $0x70] sm:$0xff]
    %v316 = vld [vmem:[#allocation7 + $0x78] sm:$0xff]
    %v317 = vld [vmem:[%s4] sm:$0x1]
    %v319 = vlaneseq
    %v320 = vshrl.u32 %v319, 7
    %v321 = vsub.s32 0, %v320
    %v322 = vrot.slane %v317, %v321
    %324 = vmatprep.subr.mxu0 0.0
    %325 = vmatpush1.msra.mxu0 %v316
    %326 = vmatprep.subr.mxu0 0.0
    %327 = vmatpush1.msra.mxu0 %v315
    %328 = vmatprep.subr.mxu0 0.0
    %329 = vmatpush1.msra.mxu0 %v314
    %330 = vmatprep.subr.mxu0 0.0
    %331 = vmatpush1.msra.mxu0 %v313
    %332 = vmatprep.subr.mxu0 0.0
    %333 = vmatpush1.msra.mxu0 %v312
    %334 = vmatprep.subr.mxu0 0.0
    %335 = vmatpush1.msra.mxu0 %v311
    %336 = vmatprep.subr.mxu0 0.0
    %337 = vmatpush1.msra.mxu0 %v310
    %338 = vmatprep.subr.mxu0 0.0
    %339 = vmatpush1.msra.mxu0 %v309
    %340 = vmatprep.subr.mxu0 0.0
    %341 = vmatpush1.msra.mxu0 %v308
    %342 = vmatprep.subr.mxu0 0.0
    %343 = vmatpush1.msra.mxu0 %v307
    %344 = vmatprep.subr.mxu0 0.0
    %345 = vmatpush1.msra.mxu0 %v306
    %346 = vmatprep.subr.mxu0 0.0
    %347 = vmatpush1.msra.mxu0 %v305
    %348 = vmatprep.subr.mxu0 0.0
    %349 = vmatpush1.msra.mxu0 %v304
    %350 = vmatprep.subr.mxu0 0.0
    %351 = vmatpush1.msra.mxu0 %v303
    %352 = vmatprep.subr.mxu0 0.0
    %353 = vmatpush1.msra.mxu0 %v302
    %354 = vmatprep.subr.mxu0 0.0
    %355 = vmatpush1.msra.mxu0 %v301
    %356 = vmatprep.subr.mxu0 0.0
    %357 = vmatpush2.msra.mxu0 0.0
    %358 = vmatprep.subr.mxu0 0.0
    %359 = vmatpush2.msra.mxu0 0.0
    %360 = vmatprep.subr.mxu0 0.0
    %361 = vmatpush2.msra.mxu0 0.0
    %362 = vmatprep.subr.mxu0 0.0
    %363 = vmatpush2.msra.mxu0 0.0
    %364 = vmatprep.subr.mxu0 0.0
    %365 = vmatpush2.msra.mxu0 0.0
    %366 = vmatprep.subr.mxu0 0.0
    %367 = vmatpush2.msra.mxu0 0.0
    %368 = vmatprep.subr.mxu0 0.0
    %369 = vmatpush2.msra.mxu0 0.0
    %370 = vmatprep.subr.mxu0 0.0
    %371 = vmatpush2.msra.mxu0 0.0
    %372 = vmatprep.subr.mxu0 0.0
    %373 = vmatpush2.msra.mxu0 0.0
    %374 = vmatprep.subr.mxu0 0.0
    %375 = vmatpush2.msra.mxu0 0.0
    %376 = vmatprep.subr.mxu0 0.0
    %377 = vmatpush2.msra.mxu0 0.0
    %378 = vmatprep.subr.mxu0 0.0
    %379 = vmatpush2.msra.mxu0 0.0
    %380 = vmatprep.subr.mxu0 0.0
    %381 = vmatpush2.msra.mxu0 0.0
    %382 = vmatprep.subr.mxu0 0.0
    %383 = vmatpush2.msra.mxu0 0.0
    %384 = vmatprep.subr.mxu0 0.0
    %385 = vmatpush2.msra.mxu0 0.0
    %386 = vmatprep.subr.mxu0 0.0
    %387 = vmatpush2.msra.mxu0 0.0
    %388 = vmatprep.mubr.f32.mxu0 0.0
    %389 = vmatmul.mubr.f32.gmra.mxu0 %v299
    %v390 = vpop.f32.mrf.mxu0
    %v391 = vadd.f32 %v322, %v390
    %v392 = vpop.f32.mrf.mxu0
    %393 = vmatprep.mubr.f32.mxu0 0.0
    %394 = vmatmul.mubr.f32.gmra.mxu0 %v300
    %v395 = vpop.f32.mrf.mxu0
    %v396 = vadd.f32 %v322, %v395
    %v397 = vpop.f32.mrf.mxu0
    %398 = vdwg.mxu0
    %399 = vst [vmem:[#allocation8] sm:$0xff] %v391
    %400 = vst [vmem:[#allocation8 + $0x8] sm:$0xff] %v396
    // Predicated region
    $region34: #{tpu_custom_call.1} parent=1 // pred_check
      _
    $region35: #{tpu_custom_call.1} parent=1 // pred_check_branch
      %402 = sbr.rel (0) target = $region37
    $region36: #{tpu_custom_call.1} parent=1 // pred_region
      %s404 = ssub.s32 256, 256
      %405 = vsyncadd [#allocation4], %s404
      %s406 = sshll.u32 [#allocation8], 4
      %s407 = int_to_ptr.vmem [resolvable:$true] %s406
      %412 = dma.vmem_to_hbm [thread:$0]  %s407, 256, %s5, [#allocation4], 128, 128, 8
    $region37: #{tpu_custom_call.1} parent=1 // pred_fallthru
      _
    // Predicated region
    $region38: #{tpu_custom_call.1} parent=1 // pred_check
      _
    $region39: #{tpu_custom_call.1} parent=1 // pred_check_branch
      %414 = sbr.rel (0) target = $region41
    $region40: #{tpu_custom_call.1} parent=1 // pred_region
      %415 = dma.done [#allocation4], 256
    $region41: #{tpu_custom_call.1} parent=1 // pred_fallthru
      _
    %416 = vsyncpa [#allocation3], 1
    %417 = vsyncpa [#allocation6], 1
    %418 = vsyncpa [#allocation4], 1

</llo_original>
